<compile_context>
chip_gen: v7x
topology: tpu7x:2x2x1
jax: 0.10.0
libtpu: 0.0.40
codegen_flags: <defaults>
</compile_context>

<pallas_src>
import jax
import jax.numpy as jnp
from jax.experimental import pallas as pl
from jax.experimental.pallas import tpu as pltpu

_LANE = 128
_TARGET_BLOCK_BYTES = 2 * 1024 * 1024  # ~2 MiB per block


def _hard_mish_kernel(x_ref, o_ref):
    """HardMish on one (block_rows, width) VMEM tile (pure VPU work)."""
    x = x_ref[...]
    o_ref[...] = (0.5 * x * jnp.clip(x + 2.0, 0.0, 2.0)).astype(o_ref.dtype)


@jax.jit
def hard_mish(x: jax.Array) -> jax.Array:
    """Elementwise HardMish; same shape & dtype as input (any layout)."""
    orig_shape = x.shape
    orig_dtype = x.dtype
    n = x.size
    itemsize = jnp.dtype(orig_dtype).itemsize

    flat = x.reshape(-1)

    # Pad only to a multiple of 128 lanes (at most 127 zeros).
    n_pad = ((n + _LANE - 1) // _LANE) * _LANE
    if n_pad != n:
        flat = jnp.pad(flat, (0, n_pad - n))

    # Widest lane-dense slab (multiple of 128) that evenly divides the size.
    width = _LANE
    for w in (2048, 1024, 512, 256):
        if n_pad % w == 0:
            width = w
            break
    rows = n_pad // width
    x2d = flat.reshape(rows, width)

    # ~2 MiB blocks, rows a multiple of 32 (keeps bf16/int8 packing aligned).
    block_rows = max(32, _TARGET_BLOCK_BYTES // (width * itemsize))
    block_rows = (block_rows // 32) * 32
    if block_rows >= rows:
        block_rows = rows  # full-extent block: always a legal block shape
    grid = (pl.cdiv(rows, block_rows),)

    cost = pl.CostEstimate(
        flops=5 * n,                       # add, 2x clamp, 2x mul per element
        transcendentals=0,
        bytes_accessed=2 * n * itemsize,   # read x + write out
    )

    out2d = pl.pallas_call(
        _hard_mish_kernel,
        out_shape=jax.ShapeDtypeStruct((rows, width), orig_dtype),
        grid_spec=pl.GridSpec(
            grid=grid,
            in_specs=[pl.BlockSpec((block_rows, width), lambda i: (i, 0))],
            out_specs=pl.BlockSpec((block_rows, width), lambda i: (i, 0)),
        ),
        compiler_params=pltpu.CompilerParams(
            dimension_semantics=("parallel",),
        ),
        cost_estimate=cost,
    )(x2d)

    out = out2d.reshape(-1)
    if n_pad != n:
        out = out[:n]  # trims only the <=127 padded elements
    return out.reshape(orig_shape)


def _hard_mish_ref(x):
    return 0.5 * x * jnp.clip(x + 2.0, 0.0, 2.0)


if __name__ == "__main__":
    key = jax.random.PRNGKey(0)

    # NCHW input, consistent with how conv-style activations are applied.
    x = jax.random.normal(key, (2, 4, 16, 16), dtype=jnp.float32)
    y = hard_mish(x)
    jax.block_until_ready(y)
    assert y.shape == x.shape and y.dtype == x.dtype
    assert bool(jnp.allclose(y, _hard_mish_ref(x), rtol=1e-6, atol=1e-6))

    # Odd size (exercises the <=127-element lane pad + masked edge block).
    x2 = jax.random.normal(jax.random.PRNGKey(1), (3, 5, 7), dtype=jnp.float32)
    y2 = hard_mish(x2)
    jax.block_until_ready(y2)
    assert y2.shape == x2.shape and y2.dtype == x2.dtype
    assert bool(jnp.allclose(y2, _hard_mish_ref(x2), rtol=1e-6, atol=1e-6))

    print("KERNEL_OK")
</pallas_src>

<mosaic_0001>
module attributes {stable_mosaic.version = 11 : i64} {
  func.func @_hard_mish_kernel(%arg0: i32, %arg1: memref<1x2048xf32, #tpu.memory_space<vmem>>, %arg2: memref<1x2048xf32, #tpu.memory_space<vmem>>) attributes {dimension_semantics = [#tpu.dimension_semantics<parallel>], iteration_bounds = array<i64: 1>, scalar_prefetch = 0 : i64, scratch_operands = 0 : i64, tpu.core_type = #tpu.core_type<tc>, window_params = [{transform_indices = @transform_0, window_bounds = array<i64: 1, 2048>}, {transform_indices = @transform_1, window_bounds = array<i64: 1, 2048>}]} {
    %c0 = arith.constant 0 : index
    %c0_0 = arith.constant 0 : index
    %0 = vector.load %arg1[%c0, %c0_0] : memref<1x2048xf32, #tpu.memory_space<vmem>>, vector<1x2048xf32>
    %cst = arith.constant 5.000000e-01 : f32
    %1 = vector.broadcast %cst : f32 to vector<1x2048xf32>
    %2 = arith.mulf %1, %0 : vector<1x2048xf32>
    %cst_1 = arith.constant 2.000000e+00 : f32
    %3 = vector.broadcast %cst_1 : f32 to vector<1x2048xf32>
    %4 = arith.addf %0, %3 : vector<1x2048xf32>
    %cst_2 = arith.constant 0.000000e+00 : f32
    %cst_3 = arith.constant 2.000000e+00 : f32
    %5 = vector.broadcast %cst_2 : f32 to vector<1x2048xf32>
    %6 = arith.maximumf %5, %4 : vector<1x2048xf32>
    %7 = vector.broadcast %cst_3 : f32 to vector<1x2048xf32>
    %8 = arith.minimumf %7, %6 : vector<1x2048xf32>
    %9 = arith.mulf %2, %8 : vector<1x2048xf32>
    %c0_4 = arith.constant 0 : index
    %c0_5 = arith.constant 0 : index
    %10 = vector.load %arg2[%c0_4, %c0_5] : memref<1x2048xf32, #tpu.memory_space<vmem>>, vector<1x2048xf32>
    tpu.vector_store %arg2[%c0_4, %c0_5], %9 {strides = array<i32>} : memref<1x2048xf32, #tpu.memory_space<vmem>>, vector<1x2048xf32>,
    return
  }
  func.func @transform_0(%arg0: i32) -> (i32, i32) {
    %c0_i32 = arith.constant 0 : i32
    %c0_i32_0 = arith.constant 0 : i32
    return %arg0, %c0_i32 : i32, i32
  }
  func.func @transform_1(%arg0: i32) -> (i32, i32) {
    %c0_i32 = arith.constant 0 : i32
    %c0_i32_0 = arith.constant 0 : i32
    return %arg0, %c0_i32 : i32, i32
  }
}

</mosaic_0001>

<llo_original>
// kernel: hard_mish.1
$region0: #{hard_mish.1}
  #allocation0 [shape = 'u32[]', space=smem, size = 0x4, offset = 0x4, fixed_abs, tag = 'smem constant byte address 0x4 - core index']
  #allocation1 [shape = 'u32[144,128]{1,0:T(1,128)}', space=vmem, size = 0x12000, scoped, tag = 'internal scratch']
  %s0 = inlined_call_operand.vmem [shape: f32[1,2048], index: 0, kind: input, shape index: {}]
  %s1 = inlined_call_operand.vmem [shape: f32[1,2048], index: 1, kind: output, shape index: {}]
  %s2 = sld [smem:[#allocation0]]
  $region14: #{hard_mish.1} parent=0
    _
  %s4 = ssub.s32 1, %s2
  %s5 = scalar_select 0, %s4, %s2
  // Predicated region
  $region2: #{hard_mish.1} parent=0 // pred_check
    _
  $region3: #{hard_mish.1} parent=0 // pred_check_branch
    %7 = sbr.rel (0) target = $region5
  $region4: #{hard_mish.1} parent=0 // pred_region
    _
  $region5: #{hard_mish.1} parent=0 // pred_fallthru
    _
  %v8 = vld [vmem:[%s0] sm:$0xff]
  %v9 = vld [vmem:[%s0 + $0x8] sm:$0xff]
  %v10 = vmul.f32 %v8, 0.5
  %v11 = vmul.f32 %v9, 0.5
  %v12 = vadd.f32 %v8, 2.0
  %v13 = vadd.f32 %v9, 2.0
  %v14 = vmax.f32 %v12, 0.0
  %v15 = vmax.f32 %v13, 0.0
  %v16 = vmin.f32 %v14, 2.0
  %v17 = vmin.f32 %v15, 2.0
  %v18 = vmul.f32 %v10, %v16
  %v19 = vmul.f32 %v11, %v17
  %20 = vst [vmem:[%s1] sm:$0xff] %v18
  %21 = vst [vmem:[%s1 + $0x8] sm:$0xff] %v19
  // Predicated region
  $region6: #{hard_mish.1} parent=0 // pred_check
    _
  $region7: #{hard_mish.1} parent=0 // pred_check_branch
    %23 = sbr.rel (0) target = $region9
  $region8: #{hard_mish.1} parent=0 // pred_region
    _
  $region9: #{hard_mish.1} parent=0 // pred_fallthru
    _
  // Predicated region
  $region10: #{hard_mish.1} parent=0 // pred_check
    _
  $region11: #{hard_mish.1} parent=0 // pred_check_branch
    %25 = sbr.rel (0) target = $region13
  $region12: #{hard_mish.1} parent=0 // pred_region
    _
  $region13: #{hard_mish.1} parent=0 // pred_fallthru
    _

</llo_original>
